<compile_context>
chip_gen: v7x
topology: tpu7x:2x2x1
jax: 0.10.0
libtpu: 0.0.40
codegen_flags: <defaults>
</compile_context>

<pallas_src>
import jax
import jax.numpy as jnp
from jax.experimental import pallas as pl
from jax.experimental.pallas import tpu as pltpu


def _resident_spec(block_shape, index_map):
    """BlockSpec for an operand whose block index never changes (weight/bias).

    Pallas keeps such blocks resident (no per-step re-DMA); requesting a
    single pipeline buffer additionally frees the useless second copy (matters
    most under v7x's tighter VMEM).  Falls back to the default spec if this
    jax build does not expose pipeline_mode / Buffered.
    """
    try:
        return pl.BlockSpec(block_shape, index_map, pipeline_mode=pl.Buffered(1))
    except (TypeError, AttributeError):
        return pl.BlockSpec(block_shape, index_map)


def _make_patch_embed_kernel(C, H, W, p, GH, GW):
    """Kernel for one (b, t) frame: fused im2col + matmul + bias."""
    K2 = C * p  # per-(patch-row, pw) feature chunk, ordered (c, ph)

    def kernel(x_ref, w_ref, b_ref, o_ref, pm_ref):
        # x_ref : (1, C, 1, H, W)  one video frame
        # w_ref : (K, D)           resident weight, K-order (pw, c, ph)
        # b_ref : (1, D)           resident bias (f32)
        # o_ref : (1, 1, GH*GW, D) output rows for this frame
        # pm_ref: (GH*GW, K)       VMEM patch-matrix scratch (compute dtype)

        # ---- fused im2col: build the patch matrix in VMEM -----------------
        for i in range(GH):                                   # static unroll
            # One row of patches: (C, p, W) slab, sliced directly off the ref
            # so only ~C*p*W elements are live per iteration.
            slab = x_ref[0, :, 0, i * p:(i + 1) * p, :]
            # (C, p, W) -> (C*p, W) is a tile-aligned relabel for p % 8 == 0;
            # one 2-D XLU transpose then moves the W=(gw,pw) index to rows.
            t = slab.reshape(C * p, W).T                      # (W, C*p)
            t3 = t.reshape(GW, p, K2)                         # aligned sublane split
            # Gather the p within-patch columns of every patch and lay them
            # out lane-contiguously: each patch becomes one lane-dense row of
            # length C*p*p with K-order (pw, c, ph).  (Concat of sublane
            # slices is used instead of a single sublane->lane reshape for
            # robust Mosaic lowering; it computes the identical layout.)
            rows = jnp.concatenate([t3[:, j, :] for j in range(p)], axis=1)
            pm_ref[i * GW:(i + 1) * GW, :] = rows.astype(pm_ref.dtype)

        # ---- single MXU matmul + f32 bias epilogue -------------------------
        acc = jnp.dot(pm_ref[...], w_ref[...],
                      preferred_element_type=jnp.float32)     # (GH*GW, D) f32
        o_ref[0, 0, :, :] = (acc + b_ref[...]).astype(o_ref.dtype)

    return kernel


def patch_embed_stem(x, conv_w, conv_b, patch_size, *,
                     compute_dtype=jnp.bfloat16, out_dtype=None):
    """Forward pass of PatchEmbedStem.

    x:      (B, C, T, H, W)
    conv_w: (dim, C, 1, p, p)   -- PyTorch Conv3d weight layout
    conv_b: (dim,)
    returns (B, T*(H/p)*(W/p), dim) in out_dtype (default: x.dtype)
    """
    B, C, T, H, W = x.shape
    p = int(patch_size)
    assert H % p == 0 and W % p == 0, "H and W must be divisible by patch size"
    GH, GW = H // p, W // p
    D = conv_w.shape[0]
    K = C * p * p
    n_rows = GH * GW
    if out_dtype is None:
        out_dtype = x.dtype

    # Host-side (one-time, tiny): permute the conv weight into the K-order the
    # in-kernel relayout produces naturally: k = pw*(C*p) + c*p + ph.
    #   (D, C, 1, p, p) -> (pw, c, ph, D) -> (K, D)
    w_k = jnp.transpose(conv_w[:, :, 0, :, :], (3, 1, 2, 0)).reshape(K, D)
    w_k = w_k.astype(compute_dtype)
    b2d = conv_b.reshape(1, D).astype(jnp.float32)

    kernel = _make_patch_embed_kernel(C, H, W, p, GH, GW)

    # VMEM budget: double-buffered frame + output blocks, resident weight/bias,
    # patch-matrix scratch.  (~5 MB for 3x224x224 frames with dim=768.)
    vmem_est = int(
        2 * C * H * W * x.dtype.itemsize
        + 2 * n_rows * D * jnp.dtype(out_dtype).itemsize
        + K * D * jnp.dtype(compute_dtype).itemsize
        + D * 4
        + n_rows * K * jnp.dtype(compute_dtype).itemsize
    )
    vmem_limit = min(int(1.5 * vmem_est) + (8 << 20), 64 << 20)

    cost = pl.CostEstimate(
        flops=2 * B * T * n_rows * K * D,
        transcendentals=0,
        bytes_accessed=int(
            B * C * T * H * W * x.dtype.itemsize
            + K * D * jnp.dtype(compute_dtype).itemsize
            + D * 4
            + B * T * n_rows * D * jnp.dtype(out_dtype).itemsize
        ),
    )

    out = pl.pallas_call(
        kernel,
        out_shape=jax.ShapeDtypeStruct((B, T, n_rows, D), out_dtype),
        grid_spec=pltpu.PrefetchScalarGridSpec(
            num_scalar_prefetch=0,
            grid=(B, T),
            in_specs=[
                # One full (C, H, W) frame per grid step.  The last two block
                # dims equal the full array dims, so the (8,128) rule holds.
                pl.BlockSpec((1, C, 1, H, W), lambda b, t: (b, 0, t, 0, 0)),
                _resident_spec((K, D), lambda b, t: (0, 0)),   # weight
                _resident_spec((1, D), lambda b, t: (0, 0)),   # bias
            ],
            out_specs=pl.BlockSpec((1, 1, n_rows, D),
                                   lambda b, t: (b, t, 0, 0)),
            scratch_shapes=[pltpu.VMEM((n_rows, K), compute_dtype)],
        ),
        compiler_params=pltpu.CompilerParams(
            dimension_semantics=("parallel", "parallel"),
            vmem_limit_bytes=vmem_limit,
        ),
        cost_estimate=cost,
    )(x, w_k, b2d)

    # (B, T, gh*gw, D) -> (B, T*gh*gw, D): contiguous merge, free in XLA.
    return out.reshape(B, T * n_rows, D)


if __name__ == "__main__":
    # Small shapes consistent with the module's forward:
    # B=2, C=3, T=4, H=W=16, patch=8, dim=128
    B, C, T, H, W = 2, 3, 4, 16, 16
    p, dim = 8, 128

    key = jax.random.PRNGKey(0)
    kx, kw, kb = jax.random.split(key, 3)
    x = jax.random.normal(kx, (B, C, T, H, W), dtype=jnp.float32)
    conv_w = jax.random.normal(kw, (dim, C, 1, p, p), dtype=jnp.float32) * 0.02
    conv_b = jax.random.normal(kb, (dim,), dtype=jnp.float32) * 0.02

    fwd = jax.jit(lambda xx, ww, bb: patch_embed_stem(xx, ww, bb, p))
    out = jax.block_until_ready(fwd(x, conv_w, conv_b))

    # Reference: real 3-D conv (NCDHW / OIDHW) + reshape/permute, as in PyTorch.
    ref = jax.lax.conv_general_dilated(
        x, conv_w,
        window_strides=(1, p, p),
        padding="VALID",
        dimension_numbers=("NCDHW", "OIDHW", "NCDHW"),
    ) + conv_b[None, :, None, None, None]
    ref = ref.reshape(B, dim, -1).transpose(0, 2, 1)

    assert out.shape == (B, T * (H // p) * (W // p), dim), out.shape
    # bf16 MXU inputs with f32 accumulation: tolerance loose vs pure f32 but
    # tight relative to the output magnitude (~0.3).
    assert jnp.allclose(out, ref, atol=2e-2, rtol=2e-2), (
        float(jnp.max(jnp.abs(out - ref))))
    print("KERNEL_OK")
</pallas_src>

<mosaic_0001>
module attributes {stable_mosaic.version = 11 : i64} {
  func.func @kernel(%arg0: i32, %arg1: i32, %arg2: memref<1x3x1x16x16xf32, #tpu.memory_space<vmem>>, %arg3: memref<192x128xbf16, #tpu.memory_space<vmem>>, %arg4: memref<1x128xf32, #tpu.memory_space<vmem>>, %arg5: memref<1x1x4x128xf32, #tpu.memory_space<vmem>>, %arg6: memref<4x192xbf16, #tpu.memory_space<vmem>>) attributes {dimension_semantics = [#tpu.dimension_semantics<parallel>, #tpu.dimension_semantics<parallel>], iteration_bounds = array<i64: 2, 4>, scalar_prefetch = 0 : i64, scratch_operands = 1 : i64, tpu.core_type = #tpu.core_type<tc>, window_params = [{transform_indices = @transform_0, window_bounds = array<i64: 1, 3, 1, 16, 16>}, {pipeline_mode = #tpu.pipeline_mode<synchronous>, transform_indices = @transform_1, window_bounds = array<i64: 192, 128>}, {pipeline_mode = #tpu.pipeline_mode<synchronous>, transform_indices = @transform_2, window_bounds = array<i64: 1, 128>}, {transform_indices = @transform_3, window_bounds = array<i64: 1, 1, 4, 128>}]} {
    %c0 = arith.constant 0 : index
    %c0_0 = arith.constant 0 : index
    %c0_1 = arith.constant 0 : index
    %c0_2 = arith.constant 0 : index
    %c0_3 = arith.constant 0 : index
    %0 = vector.load %arg2[%c0, %c0_0, %c0_1, %c0_2, %c0_3] : memref<1x3x1x16x16xf32, #tpu.memory_space<vmem>>, vector<1x3x1x8x16xf32>
    %1 = vector.shape_cast %0 : vector<1x3x1x8x16xf32> to vector<3x8x16xf32>
    %2 = vector.shape_cast %1 : vector<3x8x16xf32> to vector<24x16xf32>
    %3 = tpu.transpose %2, [1, 0] : vector<24x16xf32> -> vector<16x24xf32>
    %4 = vector.shape_cast %3 : vector<16x24xf32> to vector<2x8x24xf32>
    %5 = vector.extract_strided_slice %4 {offsets = [0, 0, 0], sizes = [2, 1, 24], strides = [1, 1, 1]} : vector<2x8x24xf32> to vector<2x1x24xf32>
    %6 = vector.shape_cast %5 : vector<2x1x24xf32> to vector<2x24xf32>
    %7 = vector.extract_strided_slice %4 {offsets = [0, 1, 0], sizes = [2, 1, 24], strides = [1, 1, 1]} : vector<2x8x24xf32> to vector<2x1x24xf32>
    %8 = vector.shape_cast %7 : vector<2x1x24xf32> to vector<2x24xf32>
    %9 = vector.extract_strided_slice %4 {offsets = [0, 2, 0], sizes = [2, 1, 24], strides = [1, 1, 1]} : vector<2x8x24xf32> to vector<2x1x24xf32>
    %10 = vector.shape_cast %9 : vector<2x1x24xf32> to vector<2x24xf32>
    %11 = vector.extract_strided_slice %4 {offsets = [0, 3, 0], sizes = [2, 1, 24], strides = [1, 1, 1]} : vector<2x8x24xf32> to vector<2x1x24xf32>
    %12 = vector.shape_cast %11 : vector<2x1x24xf32> to vector<2x24xf32>
    %13 = vector.extract_strided_slice %4 {offsets = [0, 4, 0], sizes = [2, 1, 24], strides = [1, 1, 1]} : vector<2x8x24xf32> to vector<2x1x24xf32>
    %14 = vector.shape_cast %13 : vector<2x1x24xf32> to vector<2x24xf32>
    %15 = vector.extract_strided_slice %4 {offsets = [0, 5, 0], sizes = [2, 1, 24], strides = [1, 1, 1]} : vector<2x8x24xf32> to vector<2x1x24xf32>
    %16 = vector.shape_cast %15 : vector<2x1x24xf32> to vector<2x24xf32>
    %17 = vector.extract_strided_slice %4 {offsets = [0, 6, 0], sizes = [2, 1, 24], strides = [1, 1, 1]} : vector<2x8x24xf32> to vector<2x1x24xf32>
    %18 = vector.shape_cast %17 : vector<2x1x24xf32> to vector<2x24xf32>
    %19 = vector.extract_strided_slice %4 {offsets = [0, 7, 0], sizes = [2, 1, 24], strides = [1, 1, 1]} : vector<2x8x24xf32> to vector<2x1x24xf32>
    %20 = vector.shape_cast %19 : vector<2x1x24xf32> to vector<2x24xf32>
    %21 = tpu.concatenate %6, %8, %10, %12, %14, %16, %18, %20 in 1 : vector<2x24xf32>, vector<2x24xf32>, vector<2x24xf32>, vector<2x24xf32>, vector<2x24xf32>, vector<2x24xf32>, vector<2x24xf32>, vector<2x24xf32> -> vector<2x192xf32>
    %22 = arith.truncf %21 : vector<2x192xf32> to vector<2x192xbf16>
    %c0_4 = arith.constant 0 : index
    %c0_5 = arith.constant 0 : index
    %23 = vector.load %arg6[%c0_4, %c0_5] : memref<4x192xbf16, #tpu.memory_space<vmem>>, vector<2x192xbf16>
    tpu.vector_store %arg6[%c0_4, %c0_5], %22 {strides = array<i32>} : memref<4x192xbf16, #tpu.memory_space<vmem>>, vector<2x192xbf16>,
    %c0_6 = arith.constant 0 : index
    %c0_7 = arith.constant 0 : index
    %c0_8 = arith.constant 0 : index
    %c8 = arith.constant 8 : index
    %c0_9 = arith.constant 0 : index
    %24 = vector.load %arg2[%c0_6, %c0_7, %c0_8, %c8, %c0_9] : memref<1x3x1x16x16xf32, #tpu.memory_space<vmem>>, vector<1x3x1x8x16xf32>
    %25 = vector.shape_cast %24 : vector<1x3x1x8x16xf32> to vector<3x8x16xf32>
    %26 = vector.shape_cast %25 : vector<3x8x16xf32> to vector<24x16xf32>
    %27 = tpu.transpose %26, [1, 0] : vector<24x16xf32> -> vector<16x24xf32>
    %28 = vector.shape_cast %27 : vector<16x24xf32> to vector<2x8x24xf32>
    %29 = vector.extract_strided_slice %28 {offsets = [0, 0, 0], sizes = [2, 1, 24], strides = [1, 1, 1]} : vector<2x8x24xf32> to vector<2x1x24xf32>
    %30 = vector.shape_cast %29 : vector<2x1x24xf32> to vector<2x24xf32>
    %31 = vector.extract_strided_slice %28 {offsets = [0, 1, 0], sizes = [2, 1, 24], strides = [1, 1, 1]} : vector<2x8x24xf32> to vector<2x1x24xf32>
    %32 = vector.shape_cast %31 : vector<2x1x24xf32> to vector<2x24xf32>
    %33 = vector.extract_strided_slice %28 {offsets = [0, 2, 0], sizes = [2, 1, 24], strides = [1, 1, 1]} : vector<2x8x24xf32> to vector<2x1x24xf32>
    %34 = vector.shape_cast %33 : vector<2x1x24xf32> to vector<2x24xf32>
    %35 = vector.extract_strided_slice %28 {offsets = [0, 3, 0], sizes = [2, 1, 24], strides = [1, 1, 1]} : vector<2x8x24xf32> to vector<2x1x24xf32>
    %36 = vector.shape_cast %35 : vector<2x1x24xf32> to vector<2x24xf32>
    %37 = vector.extract_strided_slice %28 {offsets = [0, 4, 0], sizes = [2, 1, 24], strides = [1, 1, 1]} : vector<2x8x24xf32> to vector<2x1x24xf32>
    %38 = vector.shape_cast %37 : vector<2x1x24xf32> to vector<2x24xf32>
    %39 = vector.extract_strided_slice %28 {offsets = [0, 5, 0], sizes = [2, 1, 24], strides = [1, 1, 1]} : vector<2x8x24xf32> to vector<2x1x24xf32>
    %40 = vector.shape_cast %39 : vector<2x1x24xf32> to vector<2x24xf32>
    %41 = vector.extract_strided_slice %28 {offsets = [0, 6, 0], sizes = [2, 1, 24], strides = [1, 1, 1]} : vector<2x8x24xf32> to vector<2x1x24xf32>
    %42 = vector.shape_cast %41 : vector<2x1x24xf32> to vector<2x24xf32>
    %43 = vector.extract_strided_slice %28 {offsets = [0, 7, 0], sizes = [2, 1, 24], strides = [1, 1, 1]} : vector<2x8x24xf32> to vector<2x1x24xf32>
    %44 = vector.shape_cast %43 : vector<2x1x24xf32> to vector<2x24xf32>
    %45 = tpu.concatenate %30, %32, %34, %36, %38, %40, %42, %44 in 1 : vector<2x24xf32>, vector<2x24xf32>, vector<2x24xf32>, vector<2x24xf32>, vector<2x24xf32>, vector<2x24xf32>, vector<2x24xf32>, vector<2x24xf32> -> vector<2x192xf32>
    %46 = arith.truncf %45 : vector<2x192xf32> to vector<2x192xbf16>
    %c2 = arith.constant 2 : index
    %c0_10 = arith.constant 0 : index
    %47 = vector.load %arg6[%c2, %c0_10] : memref<4x192xbf16, #tpu.memory_space<vmem>>, vector<2x192xbf16>
    tpu.vector_store %arg6[%c2, %c0_10], %46 {strides = array<i32>} : memref<4x192xbf16, #tpu.memory_space<vmem>>, vector<2x192xbf16>,
    %c0_11 = arith.constant 0 : index
    %c0_12 = arith.constant 0 : index
    %48 = vector.load %arg6[%c0_11, %c0_12] : memref<4x192xbf16, #tpu.memory_space<vmem>>, vector<4x192xbf16>
    %c0_13 = arith.constant 0 : index
    %c0_14 = arith.constant 0 : index
    %49 = vector.load %arg3[%c0_13, %c0_14] : memref<192x128xbf16, #tpu.memory_space<vmem>>, vector<192x128xbf16>
    %cst = arith.constant dense<0.000000e+00> : vector<4x128xf32>
    %50 = tpu.matmul %48, %49, %cst {dimension_numbers = #tpu.dot_dimension_numbers<[1], [0], [0], [1], [0, 0, 1, 1], [], []>} : vector<4x192xbf16>, vector<192x128xbf16>, vector<4x128xf32> -> vector<4x128xf32>
    %c0_15 = arith.constant 0 : index
    %c0_16 = arith.constant 0 : index
    %51 = vector.load %arg4[%c0_15, %c0_16] : memref<1x128xf32, #tpu.memory_space<vmem>>, vector<1x128xf32>
    %52 = vector.broadcast %51 : vector<1x128xf32> to vector<4x128xf32>
    %53 = arith.addf %50, %52 : vector<4x128xf32>
    %c0_17 = arith.constant 0 : index
    %c0_18 = arith.constant 0 : index
    %c0_19 = arith.constant 0 : index
    %c0_20 = arith.constant 0 : index
    %54 = vector.load %arg5[%c0_17, %c0_18, %c0_19, %c0_20] : memref<1x1x4x128xf32, #tpu.memory_space<vmem>>, vector<1x1x4x128xf32>
    %55 = vector.shape_cast %54 : vector<1x1x4x128xf32> to vector<4x128xf32>
    %56 = vector.shape_cast %53 : vector<4x128xf32> to vector<1x1x4x128xf32>
    tpu.vector_store %arg5[%c0_17, %c0_18, %c0_19, %c0_20], %56 {strides = array<i32>} : memref<1x1x4x128xf32, #tpu.memory_space<vmem>>, vector<1x1x4x128xf32>,
    return
  }
  func.func @transform_0(%arg0: i32, %arg1: i32) -> (i32, i32, i32, i32, i32) {
    %c0_i32 = arith.constant 0 : i32
    %c0_i32_0 = arith.constant 0 : i32
    %c0_i32_1 = arith.constant 0 : i32
    %c0_i32_2 = arith.constant 0 : i32
    return %arg0, %c0_i32, %arg1, %c0_i32_0, %c0_i32_1 : i32, i32, i32, i32, i32
  }
  func.func @transform_1(%arg0: i32, %arg1: i32) -> (i32, i32) {
    %c0_i32 = arith.constant 0 : i32
    %c0_i32_0 = arith.constant 0 : i32
    %c0_i32_1 = arith.constant 0 : i32
    return %c0_i32, %c0_i32_0 : i32, i32
  }
  func.func @transform_2(%arg0: i32, %arg1: i32) -> (i32, i32) {
    %c0_i32 = arith.constant 0 : i32
    %c0_i32_0 = arith.constant 0 : i32
    %c0_i32_1 = arith.constant 0 : i32
    return %c0_i32, %c0_i32_0 : i32, i32
  }
  func.func @transform_3(%arg0: i32, %arg1: i32) -> (i32, i32, i32, i32) {
    %c0_i32 = arith.constant 0 : i32
    %c0_i32_0 = arith.constant 0 : i32
    %c0_i32_1 = arith.constant 0 : i32
    return %arg0, %arg1, %c0_i32, %c0_i32_0 : i32, i32, i32, i32
  }
}

</mosaic_0001>

<llo_original>
// kernel: _lambda_.1
$region0: #{_lambda_.1}
  #allocation0 [shape = 'u32[]', space=smem, size = 0x4, offset = 0x4, fixed_abs, tag = 'smem constant byte address 0x4 - core index']
  #allocation1 [shape = 'u32[144,128]{1,0:T(1,128)}', space=vmem, size = 0x12000, scoped, tag = 'internal scratch']
  #allocation2 [shape = 'bf16[4,192]{1,0:T(4,128)(2,1)}', space=vmem, size = 0x800, scoped, tag = 'scratch operand']
  %s0 = inlined_call_operand.vmem [shape: f32[2,3,4,16,16], index: 0, kind: input, shape index: {}]
  %s1 = inlined_call_operand.vmem [shape: bf16[192,128], index: 1, kind: input, shape index: {}]
  %s2 = inlined_call_operand.vmem [shape: f32[1,128], index: 2, kind: input, shape index: {}]
  %s3 = inlined_call_operand.hbm [shape: f32[2,4,4,128], index: 3, kind: output, shape index: {}]
  %s4 = sld [smem:[#allocation0]]
  $region83: #{_lambda_.1} parent=0
    _
  %s6 = ssub.s32 1, %s4
  %s7 = scalar_select 0, %s6, %s4
  $region1: #{_lambda_.1} parent=0
    #allocation3 [shape = 'u8[49152]{0}', space=vmem, size = 0xc000, scoped, tag = 'input window, operand 0']
    #allocation4 [shape = 'u8[4096]{0}', space=vmem, size = 0x1000, scoped, tag = 'output window, operand 0']
    #allocation5 [shape = 's32[2]{0}', space=sflag, size = 0x8, scoped, tag = 'scoped memory for _lambda_.1']
    %8 = vsyncpa [#allocation5], 0
    %s9 = scalar_lea.sflag [#allocation5], 1
    %10 = vsyncpa %s9, 0
    loop: start=0, step=1, limit=10
    $region2: #{_lambda_.1} parent=1 // loop_pre_header
      _
    $region3: #{_lambda_.1} parent=1 // loop_header
      %s12 = sphi 0, %s16
      %p13 = scmp.ge.s32.totalorder %s12, 10
      %s19 = sphi 0, %s31
      %s20 = sphi 0, %s27
      %s21 = sphi 0, %s19
      %s22 = sphi 0, %s20
      %s23 = sphi 0, %s21
      %s24 = sphi 0, %s22
      %s36 = sphi 0, %s38
      %s39 = sphi 0, %s36
      %s40 = sphi 0, %s39
      %s56 = sphi 0, %s40
      %s60 = sphi 0, %s60
      %s62 = sphi 0, %s60
      %s63 = sphi 0, %s62
      %s77 = sphi 0, %s63
      %s81 = sphi 0, %s81
      %s83 = sphi 0, %s81
      %s84 = sphi 0, %s83
      %s98 = sphi 0, %s84
      %s106 = sphi 0, %s108
      %s109 = sphi 0, %s106
      %s110 = sphi 0, %s109
      %s126 = sphi 0, %s110
    $region4: #{_lambda_.1} parent=1 // loop_header_branch
      %15 = sbr.rel (%p13) target = $region8
    $region5: #{_lambda_.1} parent=1 // loop_body
      %s17 = ssub.s32 %s12, 1
      %s18 = ssub.s32 %s12, 2
      %s25 = sadd.s32 1, %s20
      %p26 = scmp.ge.s32.totalorder %s25, 4
      %s27 = scalar_select %p26, 0, %s25
      %s28 = sadd.s32 1, %s19
      %s29 = scalar_select %p26, %s28, %s19
      %p30 = scmp.ge.s32.totalorder %s29, 2
      %s31 = scalar_select %p30, 0, %s29
      %s32 = ssub.s32 %s19, %s31
      %s33 = ssub.s32 %s20, %s27
      %s34 = sor.u32 %s32, %s33
      %p35 = scmp.eq.s32.totalorder %s34, 0
      %s37 = sadd.s32 %s36, 1
      %s38 = scalar_select %p35, %s36, %s37
      %p41 = pneg %p35
      %p42 = scmp.eq.s32.totalorder %s12, 7
      %p43 = por %p41, %p42
      %p44 = scmp.ne.s32.totalorder %s36, %s39
      %p45 = scmp.eq.s32.totalorder %s12, 0
      %p46 = por %p44, %p45
      %p47 = scmp.ne.s32.totalorder %s36, %s39
      %p48 = scmp.eq.s32.totalorder %s17, 7
      %p49 = por %p47, %p48
      %p50 = scmp.ne.s32.totalorder %s39, %s40
      %p51 = scmp.eq.s32.totalorder %s17, 0
      %p52 = por %p50, %p51
      %p53 = scmp.ne.s32.totalorder %s39, %s40
      %p54 = scmp.eq.s32.totalorder %s18, 7
      %p55 = por %p53, %p54
      %p57 = scmp.ne.s32.totalorder %s40, %s56
      %p58 = scmp.eq.s32.totalorder %s18, 0
      %p59 = por %p57, %p58
      %s61 = sadd.s32 %s60, 1
      %p64 = scmp.eq.s32.totalorder %s12, 7
      %p65 = scmp.ne.s32.totalorder %s60, %s62
      %p66 = scmp.eq.s32.totalorder %s12, 0
      %p67 = por %p65, %p66
      %p68 = scmp.ne.s32.totalorder %s60, %s62
      %p69 = scmp.eq.s32.totalorder %s17, 7
      %p70 = por %p68, %p69
      %p71 = scmp.ne.s32.totalorder %s62, %s63
      %p72 = scmp.eq.s32.totalorder %s17, 0
      %p73 = por %p71, %p72
      %p74 = scmp.ne.s32.totalorder %s62, %s63
      %p75 = scmp.eq.s32.totalorder %s18, 7
      %p76 = por %p74, %p75
      %p78 = scmp.ne.s32.totalorder %s63, %s77
      %p79 = scmp.eq.s32.totalorder %s18, 0
      %p80 = por %p78, %p79
      %s82 = sadd.s32 %s81, 1
      %p85 = scmp.eq.s32.totalorder %s12, 7
      %p86 = scmp.ne.s32.totalorder %s81, %s83
      %p87 = scmp.eq.s32.totalorder %s12, 0
      %p88 = por %p86, %p87
      %p89 = scmp.ne.s32.totalorder %s81, %s83
      %p90 = scmp.eq.s32.totalorder %s17, 7
      %p91 = por %p89, %p90
      %p92 = scmp.ne.s32.totalorder %s83, %s84
      %p93 = scmp.eq.s32.totalorder %s17, 0
      %p94 = por %p92, %p93
      %p95 = scmp.ne.s32.totalorder %s83, %s84
      %p96 = scmp.eq.s32.totalorder %s18, 7
      %p97 = por %p95, %p96
      %p99 = scmp.ne.s32.totalorder %s84, %s98
      %p100 = scmp.eq.s32.totalorder %s18, 0
      %p101 = por %p99, %p100
      %s102 = ssub.s32 %s19, %s31
      %s103 = ssub.s32 %s20, %s27
      %s104 = sor.u32 %s102, %s103
      %p105 = scmp.eq.s32.totalorder %s104, 0
      %s107 = sadd.s32 %s106, 1
      %s108 = scalar_select %p105, %s106, %s107
      %p111 = pneg %p105
      %p112 = scmp.eq.s32.totalorder %s12, 7
      %p113 = por %p111, %p112
      %p114 = scmp.ne.s32.totalorder %s106, %s109
      %p115 = scmp.eq.s32.totalorder %s12, 0
      %p116 = por %p114, %p115
      %p117 = scmp.ne.s32.totalorder %s106, %s109
      %p118 = scmp.eq.s32.totalorder %s17, 7
      %p119 = por %p117, %p118
      %p120 = scmp.ne.s32.totalorder %s109, %s110
      %p121 = scmp.eq.s32.totalorder %s17, 0
      %p122 = por %p120, %p121
      %p123 = scmp.ne.s32.totalorder %s109, %s110
      %p124 = scmp.eq.s32.totalorder %s18, 7
      %p125 = por %p123, %p124
      %p127 = scmp.ne.s32.totalorder %s110, %s126
      %p128 = scmp.eq.s32.totalorder %s18, 0
      %p129 = por %p127, %p128
      %p130 = scmp.le.s32.totalorder 1, %s12
      %p131 = scmp.lt.s32.totalorder %s12, 9
      %p132 = pnand %p130, %p131
      %p133 = pneg %p132
      // Predicated region
      $region9: #{_lambda_.1} parent=5 // pred_check
        _
      $region10: #{_lambda_.1} parent=5 // pred_check_branch
        %135 = sbr.rel (%p132) target = $region12
      $region11: #{_lambda_.1} parent=5 // pred_region
        %s136 = ssub.s32 %s12, 1
        // Predicated region
        $region13: #{_lambda_.1} parent=11 // pred_check
          %p137 = pneg %p73
        $region14: #{_lambda_.1} parent=11 // pred_check_branch
          %139 = sbr.rel (%p137) target = $region16
        $region15: #{_lambda_.1} parent=11 // pred_region
          _
        $region16: #{_lambda_.1} parent=11 // pred_fallthru
          _
        // Predicated region
        $region17: #{_lambda_.1} parent=11 // pred_check
          %p140 = pneg %p94
        $region18: #{_lambda_.1} parent=11 // pred_check_branch
          %142 = sbr.rel (%p140) target = $region20
        $region19: #{_lambda_.1} parent=11 // pred_region
          _
        $region20: #{_lambda_.1} parent=11 // pred_fallthru
          _
      $region12: #{_lambda_.1} parent=5 // pred_fallthru
        _
      %p143 = scmp.lt.s32.totalorder %s12, 8
      // Predicated region
      $region21: #{_lambda_.1} parent=5 // pred_check
        %p144 = pneg %p143
      $region22: #{_lambda_.1} parent=5 // pred_check_branch
        %146 = sbr.rel (%p144) target = $region24
      $region23: #{_lambda_.1} parent=5 // pred_region
        // Predicated region
        $region25: #{_lambda_.1} parent=23 // pred_check
          %p147 = pneg %p46
        $region26: #{_lambda_.1} parent=23 // pred_check_branch
          %149 = sbr.rel (%p147) target = $region28
        $region27: #{_lambda_.1} parent=23 // pred_region
          %s150 = sand.u32 %s36, 1
          %s151 = sand.u32 %s36, 1
          %s152 = smul.addr %s151, 48
          %s153 = scalar_lea.vmem [#allocation3], %s152
          %s154 = smul.addr %s20, 2
          %s155 = smul.addr %s19, 24
          %s156 = sadd.s32 %s154, %s155
          %s157 = smul.addr %s156, 8
          %s158 = scalar_lea.vmem %s0, %s157
          // Predicated region
          $region29: #{_lambda_.1} parent=27 // pred_check
            _
          $region30: #{_lambda_.1} parent=27 // pred_check_branch
            %160 = sbr.rel (0) target = $region32
          $region31: #{_lambda_.1} parent=27 // pred_region
            // Predicated region
            $region33: #{_lambda_.1} parent=31 // pred_check
              _
            $region34: #{_lambda_.1} parent=31 // pred_check_branch
              %162 = sbr.rel (0) target = $region36
            $region35: #{_lambda_.1} parent=31 // pred_region
              // Predicated region
              $region48: #{_lambda_.1} parent=35 // pred_check
                _
              $region49: #{_lambda_.1} parent=35 // pred_check_branch
                %187 = sbr.rel (0) target = $region51
              $region50: #{_lambda_.1} parent=35 // pred_region
                loop: start=0, step=1, limit=1
                $region52: #{_lambda_.1} parent=50 // loop_pre_header
                  _
                $region53: #{_lambda_.1} parent=50 // loop_header
                  %s189 = sphi 0, %s193
                  %p190 = scmp.ge.s32.totalorder %s189, 1
                  %s194 = sphi %s158, %s158
                  %s195 = sphi %s153, %s153
                $region54: #{_lambda_.1} parent=50 // loop_header_branch
                  %192 = sbr.rel (%p190) target = $region58
                $region55: #{_lambda_.1} parent=50 // loop_body
                  %v196 = vld [vmem:[%s194] sm:$0xff]
                  %197 = vst [vmem:[%s195] sm:$0xff] %v196
                  %v198 = vld [vmem:[%s194 + $0x8] sm:$0xff]
                  %199 = vst [vmem:[%s195 + $0x8] sm:$0xff] %v198
                  %v200 = vld [vmem:[%s194 + $0x40] sm:$0xff]
                  %201 = vst [vmem:[%s195 + $0x10] sm:$0xff] %v200
                  %v202 = vld [vmem:[%s194 + $0x48] sm:$0xff]
                  %203 = vst [vmem:[%s195 + $0x18] sm:$0xff] %v202
                  %v204 = vld [vmem:[%s194 + $0x80] sm:$0xff]
                  %205 = vst [vmem:[%s195 + $0x20] sm:$0xff] %v204
                  %v206 = vld [vmem:[%s194 + $0x88] sm:$0xff]
                  %207 = vst [vmem:[%s195 + $0x28] sm:$0xff] %v206
                $region56: #{_lambda_.1} parent=50 // loop_footer
                  %s193 = sadd.s32 1, %s189
                $region57: #{_lambda_.1} parent=50 // loop_footer_branch
                  %188 = sbr.rel target = $region53
                $region58: #{_lambda_.1} parent=50 // loop_exit
                  _
              $region51: #{_lambda_.1} parent=35 // pred_fallthru
                _
              // Predicated region
              $region59: #{_lambda_.1} parent=35 // pred_check
                _
              $region60: #{_lambda_.1} parent=35 // pred_check_branch
                %209 = sbr.rel target = $region62
              $region61: #{_lambda_.1} parent=35 // pred_region
                _
              $region62: #{_lambda_.1} parent=35 // pred_fallthru
                _
            $region36: #{_lambda_.1} parent=31 // pred_fallthru
              _
            // Predicated region
            $region37: #{_lambda_.1} parent=31 // pred_check
              _
            $region38: #{_lambda_.1} parent=31 // pred_check_branch
              %164 = sbr.rel target = $region40
            $region39: #{_lambda_.1} parent=31 // pred_region
              loop: start=0, step=1, limit=1
              $region41: #{_lambda_.1} parent=39 // loop_pre_header
                _
              $region42: #{_lambda_.1} parent=39 // loop_header
                %s167 = sphi 0, %s171
                %p168 = scmp.ge.s32.totalorder %s167, 1
                %s172 = sphi %s158, %s158
                %s173 = sphi %s153, %s153
              $region43: #{_lambda_.1} parent=39 // loop_header_branch
                %170 = sbr.rel (%p168) target = $region47
              $region44: #{_lambda_.1} parent=39 // loop_body
                %v174 = vld [vmem:[%s172] sm:$0xff]
                %175 = vst [vmem:[%s173] sm:$0xff] %v174
                %v176 = vld [vmem:[%s172 + $0x8] sm:$0xff]
                %177 = vst [vmem:[%s173 + $0x8] sm:$0xff] %v176
                %v178 = vld [vmem:[%s172 + $0x40] sm:$0xff]
                %179 = vst [vmem:[%s173 + $0x10] sm:$0xff] %v178
                %v180 = vld [vmem:[%s172 + $0x48] sm:$0xff]
                %181 = vst [vmem:[%s173 + $0x18] sm:$0xff] %v180
                %v182 = vld [vmem:[%s172 + $0x80] sm:$0xff]
                %183 = vst [vmem:[%s173 + $0x20] sm:$0xff] %v182
                %v184 = vld [vmem:[%s172 + $0x88] sm:$0xff]
                %185 = vst [vmem:[%s173 + $0x28] sm:$0xff] %v184
              $region45: #{_lambda_.1} parent=39 // loop_footer
                %s171 = sadd.s32 1, %s167
              $region46: #{_lambda_.1} parent=39 // loop_footer_branch
                %166 = sbr.rel target = $region42
              $region47: #{_lambda_.1} parent=39 // loop_exit
                _
            $region40: #{_lambda_.1} parent=31 // pred_fallthru
              _
          $region32: #{_lambda_.1} parent=27 // pred_fallthru
            _
          %210 = vnop
        $region28: #{_lambda_.1} parent=23 // pred_fallthru
          _
      $region24: #{_lambda_.1} parent=5 // pred_fallthru
        _
      %p211 = scmp.le.s32.totalorder 1, %s12
      %p212 = scmp.lt.s32.totalorder %s12, 9
      %p213 = pnand %p211, %p212
      %p214 = pneg %p213
      // Predicated region
      $region63: #{_lambda_.1} parent=5 // pred_check
        _
      $region64: #{_lambda_.1} parent=5 // pred_check_branch
        %216 = sbr.rel (%p213) target = $region66
      $region65: #{_lambda_.1} parent=5 // pred_region
        %s217 = ssub.s32 %s12, 1
        %s218 = sand.u32 %s39, 1
        %s219 = sand.u32 %s39, 1
        %s220 = smul.addr %s219, 48
        %s221 = scalar_lea.vmem [#allocation3], %s220
        // Predicated region
        $region67: #{_lambda_.1} parent=65 // pred_check
          %p222 = pneg %p52
        $region68: #{_lambda_.1} parent=65 // pred_check_branch
          %224 = sbr.rel (%p222) target = $region70
        $region69: #{_lambda_.1} parent=65 // pred_region
          _
        $region70: #{_lambda_.1} parent=65 // pred_fallthru
          _
        %s225 = sand.u32 %s39, 1
        %s226 = sand.u32 %s39, 1
        %s227 = smul.addr %s226, 48
        %s228 = scalar_lea.vmem [#allocation3], %s227
        %p229 = pneg %p52
        %p230 = pneg %p49
        %p231 = pneg %p73
        %p232 = pneg %p70
        %p233 = pneg %p94
        %p234 = pneg %p91
        %p235 = pneg %p122
        %p236 = pneg %p119
        %s237 = sand.u32 %s109, 1
        %s238 = scalar_lea.sflag [#allocation5], %s237
        %s239 = sand.u32 %s109, 1
        %s240 = smul.addr %s239, 4
        %s241 = scalar_lea.vmem [#allocation4], %s240
        %v243 = vld [vmem:[%s221] sm:$0xff]
        %v244 = vld [vmem:[%s221 + $0x10] sm:$0xff]
        %v245 = vld [vmem:[%s221 + $0x20] sm:$0xff]
        %246 = vxpose.xlu0.b32.start [1/16] %v243, 128
        %247 = vxpose.xlu0.b32.cont [2/16] %v244, 128
        %248 = vxpose.xlu0.b32.cont [3/16] %v245, 128
        %249 = vxpose.xlu0.b32.cont [4/16] 0.0, 128
        %250 = vxpose.xlu0.b32.cont [5/16] 0.0, 128
        %251 = vxpose.xlu0.b32.cont [6/16] 0.0, 128
        %252 = vxpose.xlu0.b32.cont [7/16] 0.0, 128
        %253 = vxpose.xlu0.b32.cont [8/16] 0.0, 128
        %254 = vxpose.xlu0.b32.cont [9/16] 0.0, 128
        %255 = vxpose.xlu0.b32.cont [10/16] 0.0, 128
        %256 = vxpose.xlu0.b32.cont [11/16] 0.0, 128
        %257 = vxpose.xlu0.b32.cont [12/16] 0.0, 128
        %258 = vxpose.xlu0.b32.cont [13/16] 0.0, 128
        %259 = vxpose.xlu0.b32.cont [14/16] 0.0, 128
        %260 = vxpose.xlu0.b32.cont [15/16] 0.0, 128
        %261 = vxpose.xlu0.b32.end [16/16] 0.0, 128
        %v262 = vpop.trf.xlu0
        %v263 = vpop.trf.xlu0
        %v264 = vpop.trf.xlu0
        %v265 = vpop.trf.xlu0
        %v266 = vpop.trf.xlu0
        %v267 = vpop.trf.xlu0
        %v268 = vpop.trf.xlu0
        %v269 = vpop.trf.xlu0
        %v270 = vpop.trf.xlu0
        %v271 = vpop.trf.xlu0
        %v272 = vpop.trf.xlu0
        %v273 = vpop.trf.xlu0
        %v274 = vpop.trf.xlu0
        %v275 = vpop.trf.xlu0
        %v276 = vpop.trf.xlu0
        %v277 = vpop.trf.xlu0
        %v280 = vrot.slane %v263, 7
        %vm281 = vcmask 1041409
        %v282 = vsel %vm281, %v280, %v262
        %v284 = vrot.slane %v262, 1
        %v285 = vsel %vm281, %v263, %v284
        %286 = vrot.lane.b32.xlu0 %v285, 24
        %v287 = vpop.permute.xlu0 %286
        %v289 = vrot.slane %v262, 2
        %v290 = vrot.slane %v263, 1
        %v291 = vsel %vm281, %v290, %v289
        %292 = vrot.lane.b32.xlu0 %v291, 48
        %v293 = vpop.permute.xlu0 %292
        %v295 = vrot.slane %v262, 3
        %v296 = vrot.slane %v263, 2
        %v297 = vsel %vm281, %v296, %v295
        %298 = vrot.lane.b32.xlu0 %v297, 72
        %v299 = vpop.permute.xlu0 %298
        %v301 = vrot.slane %v262, 4
        %v302 = vrot.slane %v263, 3
        %v303 = vsel %vm281, %v302, %v301
        %304 = vrot.lane.b32.xlu0 %v303, 96
        %v305 = vpop.permute.xlu0 %304
        %v307 = vrot.slane %v262, 5
        %v308 = vrot.slane %v263, 4
        %v309 = vsel %vm281, %v308, %v307
        %310 = vrot.lane.b32.xlu0 %v309, 120
        %v311 = vpop.permute.xlu0 %310
        %v313 = vrot.slane %v262, 6
        %v314 = vrot.slane %v263, 5
        %v315 = vsel %vm281, %v314, %v313
        %316 = vrot.lane.b32.xlu0 %v315, 16
        %v317 = vpop.permute.xlu0 %316
        %v319 = vrot.slane %v262, 7
        %v320 = vrot.slane %v263, 6
        %v321 = vsel %vm281, %v320, %v319
        %322 = vrot.lane.b32.xlu0 %v321, 40
        %v323 = vpop.permute.xlu0 %322
        %vm325 = vcmask 195584
        %v326 = vsel %vm325, %v282, %v287
        %vm327 = vcmask 392192
        %v328 = vsel %vm327, %v326, %v293
        %vm329 = vcmask 588800
        %v330 = vsel %vm329, %v328, %v299
        %vm331 = vcmask 785408
        %v332 = vsel %vm331, %v330, %v305
        %vm333 = vcmask 982016
        %v334 = vsel %vm333, %v332, %v311
        %vm335 = vcmask 130048
        %v336 = vsel %vm335, %v311, %v317
        %vm337 = vcmask 326656
        %v338 = vsel %vm337, %v336, %v323
        %v339 = vpack.c.bf16 %v334, %v334
        %v340 = vpack.c.bf16 %v338, %v338
        %v343 = vcombine.low %v339, %v340
        %v345 = vunpack.c.l.s4 1983009808
        %v346 = vunpack.c.0.s8 %v345
        %v347 = vlaneseq
        %v348 = vshrl.u32 %v347, 7
        %v349 = vsub.s32 %v346, %v348
        %v350 = vrot.slane %v343, %v349
        %vm352 = vcmask 1040384
        %vm353 = vcmask 518146
        %vm354 = vmor %vm353, %vm352
        %355 = vst.msk [vmem:[#allocation2] sm:$0x5] %vm354, %v350
        %v356 = vld [vmem:[%s221 + $0x8] sm:$0xff]
        %v357 = vld [vmem:[%s221 + $0x18] sm:$0xff]
        %v358 = vld [vmem:[%s221 + $0x28] sm:$0xff]
        %359 = vxpose.xlu0.b32.start [1/16] %v356, 128
        %360 = vxpose.xlu0.b32.cont [2/16] %v357, 128
        %361 = vxpose.xlu0.b32.cont [3/16] %v358, 128
        %362 = vxpose.xlu0.b32.cont [4/16] 0.0, 128
        %363 = vxpose.xlu0.b32.cont [5/16] 0.0, 128
        %364 = vxpose.xlu0.b32.cont [6/16] 0.0, 128
        %365 = vxpose.xlu0.b32.cont [7/16] 0.0, 128
        %366 = vxpose.xlu0.b32.cont [8/16] 0.0, 128
        %367 = vxpose.xlu0.b32.cont [9/16] 0.0, 128
        %368 = vxpose.xlu0.b32.cont [10/16] 0.0, 128
        %369 = vxpose.xlu0.b32.cont [11/16] 0.0, 128
        %370 = vxpose.xlu0.b32.cont [12/16] 0.0, 128
        %371 = vxpose.xlu0.b32.cont [13/16] 0.0, 128
        %372 = vxpose.xlu0.b32.cont [14/16] 0.0, 128
        %373 = vxpose.xlu0.b32.cont [15/16] 0.0, 128
        %374 = vxpose.xlu0.b32.end [16/16] 0.0, 128
        %v375 = vpop.trf.xlu0
        %v376 = vpop.trf.xlu0
        %v377 = vpop.trf.xlu0
        %v378 = vpop.trf.xlu0
        %v379 = vpop.trf.xlu0
        %v380 = vpop.trf.xlu0
        %v381 = vpop.trf.xlu0
        %v382 = vpop.trf.xlu0
        %v383 = vpop.trf.xlu0
        %v384 = vpop.trf.xlu0
        %v385 = vpop.trf.xlu0
        %v386 = vpop.trf.xlu0
        %v387 = vpop.trf.xlu0
        %v388 = vpop.trf.xlu0
        %v389 = vpop.trf.xlu0
        %v390 = vpop.trf.xlu0
        %v393 = vrot.slane %v376, 7
        %v394 = vsel %vm281, %v393, %v375
        %v396 = vrot.slane %v375, 1
        %v397 = vsel %vm281, %v376, %v396
        %398 = vrot.lane.b32.xlu0 %v397, 24
        %v399 = vpop.permute.xlu0 %398
        %v401 = vrot.slane %v375, 2
        %v402 = vrot.slane %v376, 1
        %v403 = vsel %vm281, %v402, %v401
        %404 = vrot.lane.b32.xlu0 %v403, 48
        %v405 = vpop.permute.xlu0 %404
        %v407 = vrot.slane %v375, 3
        %v408 = vrot.slane %v376, 2
        %v409 = vsel %vm281, %v408, %v407
        %410 = vrot.lane.b32.xlu0 %v409, 72
        %v411 = vpop.permute.xlu0 %410
        %v413 = vrot.slane %v375, 4
        %v414 = vrot.slane %v376, 3
        %v415 = vsel %vm281, %v414, %v413
        %416 = vrot.lane.b32.xlu0 %v415, 96
        %v417 = vpop.permute.xlu0 %416
        %v419 = vrot.slane %v375, 5
        %v420 = vrot.slane %v376, 4
        %v421 = vsel %vm281, %v420, %v419
        %422 = vrot.lane.b32.xlu0 %v421, 120
        %v423 = vpop.permute.xlu0 %422
        %v425 = vrot.slane %v375, 6
        %v426 = vrot.slane %v376, 5
        %v427 = vsel %vm281, %v426, %v425
        %428 = vrot.lane.b32.xlu0 %v427, 16
        %v429 = vpop.permute.xlu0 %428
        %v431 = vrot.slane %v375, 7
        %v432 = vrot.slane %v376, 6
        %v433 = vsel %vm281, %v432, %v431
        %434 = vrot.lane.b32.xlu0 %v433, 40
        %v435 = vpop.permute.xlu0 %434
        %v437 = vsel %vm325, %v394, %v399
        %v438 = vsel %vm327, %v437, %v405
        %v439 = vsel %vm329, %v438, %v411
        %v440 = vsel %vm331, %v439, %v417
        %v441 = vsel %vm333, %v440, %v423
        %v442 = vsel %vm335, %v423, %v429
        %v443 = vsel %vm337, %v442, %v435
        %v444 = vpack.c.bf16 %v441, %v441
        %v445 = vpack.c.bf16 %v443, %v443
        %v448 = vcombine.low %v444, %v445
        %v450 = vunpack.c.l.s4 1983009808
        %v451 = vunpack.c.0.s8 %v450
        %v452 = vlaneseq
        %v453 = vshrl.u32 %v452, 7
        %v454 = vsub.s32 %v451, %v453
        %v455 = vrot.slane %v448, %v454
        %v456 = vrot.slane %v455, 7
        %vm458 = vcmask 519171
        %vm459 = vmor %vm458, %vm281
        %460 = vst.msk [vmem:[#allocation2] sm:$0xa] %vm459, %v456
        %v461 = vld [vmem:[#allocation2] sm:$0xf]
        %v462 = vld [vmem:[%s1] sm:$0xf]
        %v463 = vld [vmem:[%s1 + $0x4] sm:$0xf]
        %v464 = vld [vmem:[%s1 + $0x8] sm:$0xf]
        %v465 = vld [vmem:[%s1 + $0xc] sm:$0xf]
        %v466 = vld [vmem:[%s1 + $0x10] sm:$0xf]
        %v467 = vld [vmem:[%s1 + $0x14] sm:$0xf]
        %v468 = vld [vmem:[%s1 + $0x18] sm:$0xf]
        %v469 = vld [vmem:[%s1 + $0x1c] sm:$0xf]
        %v470 = vld [vmem:[%s1 + $0x20] sm:$0xf]
        %v471 = vld [vmem:[%s1 + $0x24] sm:$0xf]
        %v472 = vld [vmem:[%s1 + $0x28] sm:$0xf]
        %v473 = vld [vmem:[%s1 + $0x2c] sm:$0xf]
        %v474 = vld [vmem:[%s1 + $0x30] sm:$0xf]
        %v475 = vld [vmem:[%s1 + $0x34] sm:$0xf]
        %v476 = vld [vmem:[%s1 + $0x38] sm:$0xf]
        %v477 = vld [vmem:[%s1 + $0x3c] sm:$0xf]
        %v478 = vld [vmem:[%s1 + $0x40] sm:$0xf]
        %v479 = vld [vmem:[%s1 + $0x44] sm:$0xf]
        %v480 = vld [vmem:[%s1 + $0x48] sm:$0xf]
        %v481 = vld [vmem:[%s1 + $0x4c] sm:$0xf]
        %v482 = vld [vmem:[%s1 + $0x50] sm:$0xf]
        %v483 = vld [vmem:[%s1 + $0x54] sm:$0xf]
        %v484 = vld [vmem:[%s1 + $0x58] sm:$0xf]
        %v485 = vld [vmem:[%s1 + $0x5c] sm:$0xf]
        %v486 = vld [vmem:[%s2] sm:$0x1]
        %v488 = vlaneseq
        %v489 = vshrl.u32 %v488, 7
        %v490 = vsub.s32 0, %v489
        %v491 = vrot.slane %v486, %v490
        %v495 = vunpack.c.l.s4 1983009808
        %v496 = vunpack.c.0.s8 %v495
        %v497 = vlaneseq
        %v498 = vshrl.u32 %v497, 7
        %v499 = vsub.s32 %v496, %v498
        %v500 = vrot.slane %v461, %v499
        %v501 = vcombine.high %v500, %v500
        %v527 = vunpack.c.l.b16 %v462
        %v528 = vunpack.c.l.b16 %v463
        %v529 = vunpack.c.l.b16 %v464
        %v530 = vunpack.c.l.b16 %v465
        %v531 = vunpack.c.l.b16 %v466
        %v532 = vunpack.c.l.b16 %v467
        %v533 = vunpack.c.l.b16 %v468
        %v534 = vunpack.c.l.b16 %v469
        %v535 = vunpack.c.l.b16 %v470
        %v536 = vunpack.c.l.b16 %v471
        %v537 = vunpack.c.l.b16 %v472
        %v538 = vunpack.c.l.b16 %v473
        %v539 = vunpack.c.l.b16 %v474
        %v540 = vunpack.c.l.b16 %v475
        %v541 = vunpack.c.l.b16 %v476
        %v542 = vunpack.c.l.b16 %v477
        %v543 = vunpack.c.l.b16 %v478
        %v544 = vunpack.c.l.b16 %v479
        %v545 = vunpack.c.l.b16 %v480
        %v546 = vunpack.c.l.b16 %v481
        %v547 = vunpack.c.l.b16 %v482
        %v548 = vunpack.c.l.b16 %v483
        %v549 = vunpack.c.l.b16 %v484
        %v550 = vunpack.c.l.b16 %v485
        %v551 = vpack.c.b16 %v528, %v527
        %v552 = vpack.c.b16 %v530, %v529
        %v553 = vpack.c.b16 %v532, %v531
        %v554 = vpack.c.b16 %v534, %v533
        %v555 = vpack.c.b16 %v536, %v535
        %v556 = vpack.c.b16 %v538, %v537
        %v557 = vpack.c.b16 %v540, %v539
        %v558 = vpack.c.b16 %v542, %v541
        %v559 = vpack.c.b16 %v544, %v543
        %v560 = vpack.c.b16 %v546, %v545
        %v561 = vpack.c.b16 %v548, %v547
        %v562 = vpack.c.b16 %v550, %v549
        %vm575 = vcmask 523264
        %v577 = vsel %vm575, %v501, 0
        %579 = vmatprep.subr.bf16.mxu0 0
        %580 = vmatpush1.bf16.msra.mxu0 %v551
        %581 = vmatprep.subr.bf16.mxu0 0
        %582 = vmatpush1.bf16.msra.mxu0 %v552
        %583 = vmatprep.subr.bf16.mxu0 0
        %584 = vmatpush1.bf16.msra.mxu0 %v553
        %585 = vmatprep.subr.bf16.mxu0 0
        %586 = vmatpush1.bf16.msra.mxu0 %v554
        %587 = vmatprep.subr.bf16.mxu0 0
        %588 = vmatpush1.bf16.msra.mxu0 %v555
        %589 = vmatprep.subr.bf16.mxu0 0
        %590 = vmatpush1.bf16.msra.mxu0 %v556
        %591 = vmatprep.subr.bf16.mxu0 0
        %592 = vmatpush1.bf16.msra.mxu0 %v557
        %593 = vmatprep.subr.bf16.mxu0 0
        %594 = vmatpush1.bf16.msra.mxu0 %v558
        %595 = vmatprep.subr.bf16.mxu0 0
        %596 = vmatpush1.bf16.msra.mxu0 %v559
        %597 = vmatprep.subr.bf16.mxu0 0
        %598 = vmatpush1.bf16.msra.mxu0 %v560
        %599 = vmatprep.subr.bf16.mxu0 0
        %600 = vmatpush1.bf16.msra.mxu0 %v561
        %601 = vmatprep.subr.bf16.mxu0 0
        %602 = vmatpush1.bf16.msra.mxu0 %v562
        %603 = vmatprep.subr.bf16.mxu0 0
        %604 = vmatpush1.bf16.msra.mxu0 0
        %605 = vmatprep.subr.bf16.mxu0 0
        %606 = vmatpush1.bf16.msra.mxu0 0
        %607 = vmatprep.subr.bf16.mxu0 0
        %608 = vmatpush1.bf16.msra.mxu0 0
        %609 = vmatprep.subr.bf16.mxu0 0
        %610 = vmatpush1.bf16.msra.mxu0 0
        %611 = vmatprep.mubr.bf16.mxu0 %v577
        %612 = vmatmul.mubr.bf16.gmra.mrb[0].mxu0 %v500
        %v613 = vpop.f32.mrb[0].mxu0
        %v614 = vadd.f32 %v491, %v613
        %v615 = vpop.f32.mrb[0].mxu0
        %v616 = vpop.f32.mrb[0].mxu0
        %v617 = vpop.f32.mrb[0].mxu0
        %618 = vdwg.mxu0
        %619 = vst [vmem:[%s241] sm:$0xf] %v614
        %s620 = sand.u32 %s109, 1
        %s621 = scalar_lea.sflag [#allocation5], %s620
        %s622 = sand.u32 %s109, 1
        %s623 = smul.addr %s622, 4
        %s624 = scalar_lea.vmem [#allocation4], %s623
        // Predicated region
        $region71: #{_lambda_.1} parent=65 // pred_check
          %p625 = pneg %p119
        $region72: #{_lambda_.1} parent=65 // pred_check_branch
          %627 = sbr.rel (%p625) target = $region74
        $region73: #{_lambda_.1} parent=65 // pred_region
          %s629 = ssub.s32 64, 64
          %630 = vsyncadd %s621, %s629
          %s631 = smul.addr %s21, 4
          %s632 = sadd.s32 %s22, %s631
          %s633 = smul.addr %s632, 64
          %s634 = scalar_lea.hbm %s3, %s633
          %s636 = sshll.u32 %s624, 4
          %s637 = int_to_ptr.vmem [resolvable:$true] %s636
          %639 = dma.vmem_to_hbm [thread:$0]  %s637, 64, %s634, %s621
        $region74: #{_lambda_.1} parent=65 // pred_fallthru
          _
      $region66: #{_lambda_.1} parent=5 // pred_fallthru
        _
      %p640 = scmp.le.s32.totalorder 2, %s12
      // Predicated region
      $region75: #{_lambda_.1} parent=5 // pred_check
        %p641 = pneg %p640
      $region76: #{_lambda_.1} parent=5 // pred_check_branch
        %643 = sbr.rel (%p641) target = $region78
      $region77: #{_lambda_.1} parent=5 // pred_region
        %s644 = ssub.s32 %s12, 2
        // Predicated region
        $region79: #{_lambda_.1} parent=77 // pred_check
          %p645 = pneg %p125
        $region80: #{_lambda_.1} parent=77 // pred_check_branch
          %647 = sbr.rel (%p645) target = $region82
        $region81: #{_lambda_.1} parent=77 // pred_region
          %s648 = sand.u32 %s110, 1
          %s649 = scalar_lea.sflag [#allocation5], %s648
          %s650 = sand.u32 %s110, 1
          %s651 = smul.addr %s650, 4
          %s652 = scalar_lea.vmem [#allocation4], %s651
          %653 = dma.done %s649, 64
        $region82: #{_lambda_.1} parent=77 // pred_fallthru
          _
      $region78: #{_lambda_.1} parent=5 // pred_fallthru
        _
    $region6: #{_lambda_.1} parent=1 // loop_footer
      %s16 = sadd.s32 1, %s12
    $region7: #{_lambda_.1} parent=1 // loop_footer_branch
      %11 = sbr.rel target = $region3
    $region8: #{_lambda_.1} parent=1 // loop_exit
      _
    %654 = vsyncpa [#allocation5], 1
    %s655 = scalar_lea.sflag [#allocation5], 1
    %656 = vsyncpa %s655, 1

</llo_original>
